<compile_context>
chip_gen: v6e
topology: v6e:2x2x1
jax: 0.10.0
libtpu: 0.0.40
codegen_flags: <defaults>
</compile_context>

<pallas_src>
import math
import functools

import jax
import jax.numpy as jnp
import numpy as np
from jax.experimental import pallas as pl
from jax.experimental.pallas import tpu as pltpu


def _eca_kernel(x_ref, w_ref, o_ref, *, k, c, hw_true):
    """x_ref/o_ref: (TB, C, HW_pad) VMEM tiles.  w_ref: (k,) SMEM."""
    pad = (k - 1) // 2

    # --- global average pool over spatial positions.  The lane padding is
    #     zeros so it does not change the sum; divide by the true HW.
    #     C stays on sublanes (keepdims).  This read of the slab dies at the
    #     reduction, bounding its live range. ---
    y = jnp.sum(x_ref[...].astype(jnp.float32), axis=2, keepdims=True)   # (TB, C, 1)
    y = y * jnp.float32(1.0 / hw_true)

    # --- Conv1d(1, 1, k, padding=pad, bias=False) along the channel axis:
    #     out[ci] = sum_j w[j] * y[ci + j - pad], zero outside [0, C).
    #     Implemented as sublane rotations + edge masks (k is small & static). ---
    acc = w_ref[pad] * y
    if k > 1:
        ch = jax.lax.broadcasted_iota(jnp.int32, y.shape, dimension=1)
        for j in range(k):
            if j == pad:
                continue
            s = pad - j                                    # signed shift, |s| <= pad
            shifted = pltpu.roll(y, shift=s % c, axis=1)   # sublane rotation
            valid = (ch >= s) if s > 0 else (ch < c + s)   # zero the wrapped taps
            acc = acc + w_ref[j] * jnp.where(valid, shifted, jnp.float32(0.0))

    scale = jax.nn.sigmoid(acc)                            # (TB, C, 1) f32

    # --- channel-wise rescale; re-read the slab so the store is fed directly
    #     from VMEM (no slab-sized value lives across the conv/sigmoid). ---
    o_ref[...] = (x_ref[...].astype(jnp.float32) * scale).astype(o_ref.dtype)


def _pick_batch_block(B, per_batch_bytes, target_bytes=2 << 20, block_cap_bytes=4 << 20):
    """Largest divisor of B whose block is ~target_bytes, capped so the
    double-buffered in+out working set stays well under scoped VMEM."""
    tb = max(1, min(B, target_bytes // max(per_batch_bytes, 1)))
    while B % tb:
        tb -= 1
    while tb > 1 and tb * per_batch_bytes > block_cap_bytes:
        tb -= 1
        while B % tb:
            tb -= 1
    # v7x megacore: prefer >= 2 grid steps when there is more than one batch.
    if B >= 2 and B // tb < 2:
        tb = max(1, B // 2)
        while B % tb:
            tb -= 1
    return tb


def eca_block_forward(x, w):
    """x: (B, C, H, W), w: (k,) Conv1d(1, 1, k, bias=False) weights."""
    B, C, H, W = x.shape
    k = int(w.shape[0])
    hw = H * W
    hw_pad = ((hw + 127) // 128) * 128          # lane-dense store path
    itemsize = jnp.dtype(x.dtype).itemsize

    x_flat = x.reshape(B, C, hw)
    if hw_pad != hw:
        x_flat = jnp.pad(x_flat, ((0, 0), (0, 0), (0, hw_pad - hw)))

    per_batch_bytes = C * hw_pad * itemsize
    tb = _pick_batch_block(B, per_batch_bytes)
    block_bytes = tb * per_batch_bytes
    # in + out, double-buffered, plus slack; kept under v7x's 64 MiB physical VMEM.
    # Note: for per-batch slabs >~8 MiB a two-pass design (pool+conv+sigmoid
    # producing (B, C) scales, then an HW-tiled rescale kernel) would be used
    # instead of growing vmem_limit_bytes further.
    vmem_limit = int(min(48 << 20, max(16 << 20, 6 * block_bytes)))

    out_flat = pl.pallas_call(
        functools.partial(_eca_kernel, k=k, c=C, hw_true=hw),
        out_shape=jax.ShapeDtypeStruct((B, C, hw_pad), x.dtype),
        grid=(B // tb,),
        in_specs=[
            pl.BlockSpec((tb, C, hw_pad), lambda b: (b, 0, 0)),
            pl.BlockSpec(memory_space=pltpu.MemorySpace.SMEM),
        ],
        out_specs=pl.BlockSpec((tb, C, hw_pad), lambda b: (b, 0, 0)),
        compiler_params=pltpu.CompilerParams(
            dimension_semantics=("parallel",),
            vmem_limit_bytes=vmem_limit,
        ),
    )(x_flat, w)

    if hw_pad != hw:
        out_flat = out_flat[:, :, :hw]
    return out_flat.reshape(B, C, H, W)


def eca_block_reference(x, w):
    """Pure-JAX reference mirroring the PyTorch forward exactly."""
    B, C, H, W = x.shape
    k = int(w.shape[0])
    pad = (k - 1) // 2
    y = jnp.mean(x.astype(jnp.float32), axis=(2, 3))       # (B, C)
    ypad = jnp.pad(y, ((0, 0), (pad, pad)))
    conv = jnp.zeros_like(y)
    for j in range(k):
        conv = conv + w[j] * ypad[:, j:j + C]               # Conv1d(1,1,k), bias=False
    s = jax.nn.sigmoid(conv)
    return (x.astype(jnp.float32) * s[:, :, None, None]).astype(x.dtype)


def eca_kernel_size(channel, b=1, gamma=2):
    kernel_size = int(abs((math.log(channel, 2) + b) / gamma))
    kernel_size = kernel_size if kernel_size % 2 else kernel_size + 1
    return kernel_size


if __name__ == "__main__":
    key = jax.random.PRNGKey(0)

    configs = [
        (2, 16, 16, 16),   # HW = 256, already a multiple of 128
        (3, 16, 12, 12),   # HW = 144 -> padded to 256 (lane-dense store path)
    ]
    for (B, C, H, W) in configs:
        k = eca_kernel_size(C)                  # C=16 -> k=3
        key, kx, kw = jax.random.split(key, 3)
        x = jax.random.normal(kx, (B, C, H, W), dtype=jnp.float32)
        # Deterministic Conv1d(1, 1, k, bias=False) weight init (PyTorch-style bound).
        bound = 1.0 / math.sqrt(k)
        w = jax.random.uniform(kw, (k,), dtype=jnp.float32, minval=-bound, maxval=bound)

        out = jax.block_until_ready(eca_block_forward(x, w))
        ref = jax.block_until_ready(eca_block_reference(x, w))

        assert out.shape == x.shape and out.dtype == x.dtype
        np.testing.assert_allclose(np.asarray(out), np.asarray(ref), rtol=1e-5, atol=1e-5)

    print("KERNEL_OK")
</pallas_src>

<mosaic_0001>
module attributes {stable_mosaic.version = 11 : i64} {
  func.func @_eca_kernel(%arg0: i32, %arg1: memref<1x16x256xf32, #tpu.memory_space<vmem>>, %arg2: memref<3xf32, #tpu.memory_space<smem>>, %arg3: memref<1x16x256xf32, #tpu.memory_space<vmem>>) attributes {dimension_semantics = [#tpu.dimension_semantics<parallel>], iteration_bounds = array<i64: 2>, scalar_prefetch = 0 : i64, scratch_operands = 0 : i64, tpu.core_type = #tpu.core_type<tc>, window_params = [{transform_indices = @transform_0, window_bounds = array<i64: 1, 16, 256>}, {transform_indices = @transform_1, window_bounds = array<i64: 3>}, {transform_indices = @transform_2, window_bounds = array<i64: 1, 16, 256>}]} {
    %c0 = arith.constant 0 : index
    %c0_0 = arith.constant 0 : index
    %c0_1 = arith.constant 0 : index
    %0 = vector.load %arg1[%c0, %c0_0, %c0_1] : memref<1x16x256xf32, #tpu.memory_space<vmem>>, vector<1x16x256xf32>
    %cst = arith.constant dense<0.000000e+00> : vector<1x16xf32>
    %1 = vector.multi_reduction <add>, %0, %cst [2] : vector<1x16x256xf32> to vector<1x16xf32>
    %2 = vector.shape_cast %1 : vector<1x16xf32> to vector<1x16x1xf32>
    %cst_2 = arith.constant 3.906250e-03 : f32
    %3 = vector.broadcast %cst_2 : f32 to vector<1x16x1xf32>
    %4 = arith.mulf %2, %3 : vector<1x16x1xf32>
    %c1 = arith.constant 1 : index
    %5 = memref.load %arg2[%c1] : memref<3xf32, #tpu.memory_space<smem>>
    %6 = vector.broadcast %5 : f32 to vector<1x16x1xf32>
    %7 = arith.mulf %6, %4 : vector<1x16x1xf32>
    %8 = tpu.iota {dimensions = array<i32: 1>} : vector<1x16x1xi32>
    %c1_i32 = arith.constant 1 : i32
    %9 = tpu.dynamic_rotate %4 by %c1_i32 dim 1 : vector<1x16x1xf32>, i32 -> vector<1x16x1xf32>
    %c1_i32_3 = arith.constant 1 : i32
    %10 = vector.broadcast %c1_i32_3 : i32 to vector<1x16x1xi32>
    %11 = arith.cmpi sge, %8, %10 : vector<1x16x1xi32>
    %c0_4 = arith.constant 0 : index
    %12 = memref.load %arg2[%c0_4] : memref<3xf32, #tpu.memory_space<smem>>
    %cst_5 = arith.constant 0.000000e+00 : f32
    %13 = vector.broadcast %cst_5 : f32 to vector<1x16x1xf32>
    %14 = arith.select %11, %9, %13 : vector<1x16x1xi1>, vector<1x16x1xf32>
    %15 = vector.broadcast %12 : f32 to vector<1x16x1xf32>
    %16 = arith.mulf %15, %14 : vector<1x16x1xf32>
    %17 = arith.addf %7, %16 : vector<1x16x1xf32>
    %c15_i32 = arith.constant 15 : i32
    %18 = tpu.dynamic_rotate %4 by %c15_i32 dim 1 : vector<1x16x1xf32>, i32 -> vector<1x16x1xf32>
    %c15_i32_6 = arith.constant 15 : i32
    %19 = vector.broadcast %c15_i32_6 : i32 to vector<1x16x1xi32>
    %20 = arith.cmpi slt, %8, %19 : vector<1x16x1xi32>
    %c2 = arith.constant 2 : index
    %21 = memref.load %arg2[%c2] : memref<3xf32, #tpu.memory_space<smem>>
    %cst_7 = arith.constant 0.000000e+00 : f32
    %22 = vector.broadcast %cst_7 : f32 to vector<1x16x1xf32>
    %23 = arith.select %20, %18, %22 : vector<1x16x1xi1>, vector<1x16x1xf32>
    %24 = vector.broadcast %21 : f32 to vector<1x16x1xf32>
    %25 = arith.mulf %24, %23 : vector<1x16x1xf32>
    %26 = arith.addf %17, %25 : vector<1x16x1xf32>
    %27 = arith.negf %26 : vector<1x16x1xf32>
    %28 = math.exp %27 : vector<1x16x1xf32>
    %cst_8 = arith.constant 1.000000e+00 : f32
    %29 = vector.broadcast %cst_8 : f32 to vector<1x16x1xf32>
    %30 = arith.addf %29, %28 : vector<1x16x1xf32>
    %31 = arith.divf %29, %30 : vector<1x16x1xf32>
    %c0_9 = arith.constant 0 : index
    %c0_10 = arith.constant 0 : index
    %c0_11 = arith.constant 0 : index
    %32 = vector.load %arg1[%c0_9, %c0_10, %c0_11] : memref<1x16x256xf32, #tpu.memory_space<vmem>>, vector<1x16x256xf32>
    %33 = vector.broadcast %31 : vector<1x16x1xf32> to vector<1x16x256xf32>
    %34 = arith.mulf %32, %33 : vector<1x16x256xf32>
    %c0_12 = arith.constant 0 : index
    %c0_13 = arith.constant 0 : index
    %c0_14 = arith.constant 0 : index
    %35 = vector.load %arg3[%c0_12, %c0_13, %c0_14] : memref<1x16x256xf32, #tpu.memory_space<vmem>>, vector<1x16x256xf32>
    tpu.vector_store %arg3[%c0_12, %c0_13, %c0_14], %34 {strides = array<i32>} : memref<1x16x256xf32, #tpu.memory_space<vmem>>, vector<1x16x256xf32>,
    return
  }
  func.func @transform_0(%arg0: i32) -> (i32, i32, i32) {
    %c0_i32 = arith.constant 0 : i32
    %c0_i32_0 = arith.constant 0 : i32
    %c0_i32_1 = arith.constant 0 : i32
    return %arg0, %c0_i32, %c0_i32_0 : i32, i32, i32
  }
  func.func @transform_1(%arg0: i32) -> i32 {
    %c0_i32 = arith.constant 0 : i32
    %c0_i32_0 = arith.constant 0 : i32
    return %c0_i32 : i32
  }
  func.func @transform_2(%arg0: i32) -> (i32, i32, i32) {
    %c0_i32 = arith.constant 0 : i32
    %c0_i32_0 = arith.constant 0 : i32
    %c0_i32_1 = arith.constant 0 : i32
    return %arg0, %c0_i32, %c0_i32_0 : i32, i32, i32
  }
}

</mosaic_0001>

<llo_original>
// kernel: tpu_custom_call.1
$region0: #{tpu_custom_call.1}
  #allocation0 [shape = 'u32[]', space=smem, size = 0x4, offset = 0x4, fixed_abs, tag = 'smem constant byte address 0x4 - core index']
  #allocation1 [shape = 'u32[144,128]{1,0:T(1,128)}', space=vmem, size = 0x12000, scoped, tag = 'internal scratch']
  %s0 = inlined_call_operand.hbm [shape: f32[2,16,256], index: 0, kind: input, shape index: {}]
  %s1 = inlined_call_operand.vmem [shape: f32[3], index: 1, kind: input, shape index: {}]
  %s2 = inlined_call_operand.hbm [shape: f32[2,16,256], index: 2, kind: output, shape index: {}]
  %s3 = sld [smem:[#allocation0]]
  $region49: #{tpu_custom_call.1} parent=0
    _
  %s5 = ssub.s32 1, %s3
  %s6 = scalar_select 0, %s5, %s3
  $region1: #{tpu_custom_call.1} parent=0
    #allocation2 [shape = 'u8[32768]{0}', space=vmem, size = 0x8000, scoped, tag = 'input window, operand 0']
    #allocation3 [shape = 's32[2]{0}', space=sflag, size = 0x8, scoped, tag = 'scoped memory for tpu_custom_call.1']
    #allocation4 [shape = 's32[2]{0}', space=sflag, size = 0x8, scoped, tag = 'scoped memory for tpu_custom_call.1']
    #allocation5 [shape = 's32[2]{0}', space=sflag, size = 0x8, scoped, tag = 'scoped memory for tpu_custom_call.1']
    #allocation6 [shape = 'u8[512]{0}', space=smem, size = 0x200, scoped, tag = 'input window, operand 1, single buffered']
    #allocation7 [shape = 'u8[32768]{0}', space=vmem, size = 0x8000, scoped, tag = 'output window, operand 0']
    %7 = vsyncpa [#allocation3], 0
    %s8 = scalar_lea.sflag [#allocation3], 1
    %9 = vsyncpa %s8, 0
    %10 = vsyncpa [#allocation5], 0
    %11 = vsyncpa [#allocation4], 0
    %s12 = scalar_lea.sflag [#allocation4], 1
    %13 = vsyncpa %s12, 0
    loop: start=0, step=1, limit=4
    $region2: #{tpu_custom_call.1} parent=1 // loop_pre_header
      _
    $region3: #{tpu_custom_call.1} parent=1 // loop_header
      %s15 = sphi 0, %s19
      %p16 = scmp.ge.s32.totalorder %s15, 4
      %s25 = sphi 0, %s27
      %s28 = sphi 0, %s25
      %s29 = sphi 0, %s28
      %s45 = sphi 0, %s29
      %s49 = sphi 0, %s49
      %s51 = sphi 0, %s49
      %s52 = sphi 0, %s51
      %s66 = sphi 0, %s52
      %s72 = sphi 0, %s74
      %s75 = sphi 0, %s72
      %s76 = sphi 0, %s75
      %s92 = sphi 0, %s76
    $region4: #{tpu_custom_call.1} parent=1 // loop_header_branch
      %18 = sbr.rel (%p16) target = $region8
    $region5: #{tpu_custom_call.1} parent=1 // loop_body
      %s20 = ssub.s32 %s15, 1
      %s21 = ssub.s32 %s15, 2
      %s22 = sadd.s32 %s15, 1
      %s23 = ssub.s32 %s15, %s22
      %p24 = scmp.eq.s32.totalorder %s23, 0
      %s26 = sadd.s32 %s25, 1
      %s27 = scalar_select %p24, %s25, %s26
      %p30 = pneg %p24
      %p31 = scmp.eq.s32.totalorder %s15, 1
      %p32 = por %p30, %p31
      %p33 = scmp.ne.s32.totalorder %s25, %s28
      %p34 = scmp.eq.s32.totalorder %s15, 0
      %p35 = por %p33, %p34
      %p36 = scmp.ne.s32.totalorder %s25, %s28
      %p37 = scmp.eq.s32.totalorder %s20, 1
      %p38 = por %p36, %p37
      %p39 = scmp.ne.s32.totalorder %s28, %s29
      %p40 = scmp.eq.s32.totalorder %s20, 0
      %p41 = por %p39, %p40
      %p42 = scmp.ne.s32.totalorder %s28, %s29
      %p43 = scmp.eq.s32.totalorder %s21, 1
      %p44 = por %p42, %p43
      %p46 = scmp.ne.s32.totalorder %s29, %s45
      %p47 = scmp.eq.s32.totalorder %s21, 0
      %p48 = por %p46, %p47
      %s50 = sadd.s32 %s49, 1
      %p53 = scmp.eq.s32.totalorder %s15, 1
      %p54 = scmp.ne.s32.totalorder %s49, %s51
      %p55 = scmp.eq.s32.totalorder %s15, 0
      %p56 = por %p54, %p55
      %p57 = scmp.ne.s32.totalorder %s49, %s51
      %p58 = scmp.eq.s32.totalorder %s20, 1
      %p59 = por %p57, %p58
      %p60 = scmp.ne.s32.totalorder %s51, %s52
      %p61 = scmp.eq.s32.totalorder %s20, 0
      %p62 = por %p60, %p61
      %p63 = scmp.ne.s32.totalorder %s51, %s52
      %p64 = scmp.eq.s32.totalorder %s21, 1
      %p65 = por %p63, %p64
      %p67 = scmp.ne.s32.totalorder %s52, %s66
      %p68 = scmp.eq.s32.totalorder %s21, 0
      %p69 = por %p67, %p68
      %s70 = ssub.s32 %s15, %s22
      %p71 = scmp.eq.s32.totalorder %s70, 0
      %s73 = sadd.s32 %s72, 1
      %s74 = scalar_select %p71, %s72, %s73
      %p77 = pneg %p71
      %p78 = scmp.eq.s32.totalorder %s15, 1
      %p79 = por %p77, %p78
      %p80 = scmp.ne.s32.totalorder %s72, %s75
      %p81 = scmp.eq.s32.totalorder %s15, 0
      %p82 = por %p80, %p81
      %p83 = scmp.ne.s32.totalorder %s72, %s75
      %p84 = scmp.eq.s32.totalorder %s20, 1
      %p85 = por %p83, %p84
      %p86 = scmp.ne.s32.totalorder %s75, %s76
      %p87 = scmp.eq.s32.totalorder %s20, 0
      %p88 = por %p86, %p87
      %p89 = scmp.ne.s32.totalorder %s75, %s76
      %p90 = scmp.eq.s32.totalorder %s21, 1
      %p91 = por %p89, %p90
      %p93 = scmp.ne.s32.totalorder %s76, %s92
      %p94 = scmp.eq.s32.totalorder %s21, 0
      %p95 = por %p93, %p94
      %p96 = scmp.le.s32.totalorder 1, %s15
      %p97 = scmp.lt.s32.totalorder %s15, 3
      %p98 = pnand %p96, %p97
      %p99 = pneg %p98
      // Predicated region
      $region9: #{tpu_custom_call.1} parent=5 // pred_check
        _
      $region10: #{tpu_custom_call.1} parent=5 // pred_check_branch
        %101 = sbr.rel (%p98) target = $region12
      $region11: #{tpu_custom_call.1} parent=5 // pred_region
        %s102 = ssub.s32 %s15, 1
        // Predicated region
        $region13: #{tpu_custom_call.1} parent=11 // pred_check
          %p103 = pneg %p62
        $region14: #{tpu_custom_call.1} parent=11 // pred_check_branch
          %105 = sbr.rel (%p103) target = $region16
        $region15: #{tpu_custom_call.1} parent=11 // pred_region
          %s107 = ssub.s32 16, 16
          %108 = vsyncadd [#allocation5], %s107
          %s110 = sshll.u32 %s1, 4
          %s111 = int_to_ptr.vmem [resolvable:$true] %s110
          %113 = dma.vmem_to_smem %s111, 16, [#allocation6], [#allocation5]
        $region16: #{tpu_custom_call.1} parent=11 // pred_fallthru
          _
      $region12: #{tpu_custom_call.1} parent=5 // pred_fallthru
        _
      %p114 = scmp.lt.s32.totalorder %s15, 2
      // Predicated region
      $region17: #{tpu_custom_call.1} parent=5 // pred_check
        %p115 = pneg %p114
      $region18: #{tpu_custom_call.1} parent=5 // pred_check_branch
        %117 = sbr.rel (%p115) target = $region20
      $region19: #{tpu_custom_call.1} parent=5 // pred_region
        // Predicated region
        $region21: #{tpu_custom_call.1} parent=19 // pred_check
          %p118 = pneg %p35
        $region22: #{tpu_custom_call.1} parent=19 // pred_check_branch
          %120 = sbr.rel (%p118) target = $region24
        $region23: #{tpu_custom_call.1} parent=19 // pred_region
          %s121 = sand.u32 %s25, 1
          %s122 = scalar_lea.sflag [#allocation3], %s121
          %s123 = sand.u32 %s25, 1
          %s124 = smul.addr %s123, 32
          %s125 = scalar_lea.vmem [#allocation2], %s124
          %s127 = ssub.s32 512, 512
          %128 = vsyncadd %s122, %s127
          %s129 = smul.addr %s15, 4
          %s130 = smul.addr %s129, 128
          %s131 = scalar_lea.hbm %s0, %s130
          %s132 = sshll.u32 %s125, 4
          %s133 = int_to_ptr.vmem [resolvable:$true] %s132
          %138 = dma.hbm_to_vmem [thread:$0]  %s131, 512, %s133, %s122, 256, 256, 16
        $region24: #{tpu_custom_call.1} parent=19 // pred_fallthru
          _
      $region20: #{tpu_custom_call.1} parent=5 // pred_fallthru
        _
      %p139 = scmp.le.s32.totalorder 1, %s15
      %p140 = scmp.lt.s32.totalorder %s15, 3
      %p141 = pnand %p139, %p140
      %p142 = pneg %p141
      // Predicated region
      $region25: #{tpu_custom_call.1} parent=5 // pred_check
        _
      $region26: #{tpu_custom_call.1} parent=5 // pred_check_branch
        %144 = sbr.rel (%p141) target = $region28
      $region27: #{tpu_custom_call.1} parent=5 // pred_region
        %s145 = ssub.s32 %s15, 1
        %s146 = sand.u32 %s28, 1
        %s147 = scalar_lea.sflag [#allocation3], %s146
        %s148 = sand.u32 %s28, 1
        %s149 = smul.addr %s148, 32
        %s150 = scalar_lea.vmem [#allocation2], %s149
        // Predicated region
        $region29: #{tpu_custom_call.1} parent=27 // pred_check
          %p151 = pneg %p41
        $region30: #{tpu_custom_call.1} parent=27 // pred_check_branch
          %153 = sbr.rel (%p151) target = $region32
        $region31: #{tpu_custom_call.1} parent=27 // pred_region
          %154 = dma.done %s147, 512
        $region32: #{tpu_custom_call.1} parent=27 // pred_fallthru
          _
        // Predicated region
        $region33: #{tpu_custom_call.1} parent=27 // pred_check
          %p155 = pneg %p62
        $region34: #{tpu_custom_call.1} parent=27 // pred_check_branch
          %157 = sbr.rel (%p155) target = $region36
        $region35: #{tpu_custom_call.1} parent=27 // pred_region
          %158 = dma.done [#allocation5], 16
        $region36: #{tpu_custom_call.1} parent=27 // pred_fallthru
          _
        %159 = sfence
        %s160 = sand.u32 %s28, 1
        %s161 = scalar_lea.sflag [#allocation3], %s160
        %s162 = sand.u32 %s28, 1
        %s163 = smul.addr %s162, 32
        %s164 = scalar_lea.vmem [#allocation2], %s163
        %p165 = pneg %p41
        %p166 = pneg %p38
        %p167 = pneg %p62
        %p168 = pneg %p59
        %p169 = pneg %p88
        %p170 = pneg %p85
        %s171 = sand.u32 %s75, 1
        %s172 = scalar_lea.sflag [#allocation4], %s171
        %s173 = sand.u32 %s75, 1
        %s174 = smul.addr %s173, 32
        %s175 = scalar_lea.vmem [#allocation7], %s174
        %v176 = vld [vmem:[%s150] sm:$0xff]
        %v177 = vld [vmem:[%s150 + $0x8] sm:$0xff]
        %v178 = vld [vmem:[%s150 + $0x10] sm:$0xff]
        %v179 = vld [vmem:[%s150 + $0x18] sm:$0xff]
        %v180 = vadd.f32 %v176, %v177
        %181 = vadd.xlane.f32.xlu0 %v180
        %v182 = vpop.xlane.xlu0 %181
        %v183 = vadd.f32 %v178, %v179
        %184 = vadd.xlane.f32.xlu0 %v183
        %v185 = vpop.xlane.xlu0 %184
        %v186 = vmul.f32 %v182, 0.00390625
        %v187 = vmul.f32 %v185, 0.00390625
        %s188 = sld [smem:[#allocation6 + $0x1]]
        %v189 = vstv %s188
        %v190 = vmul.f32 %v189, %v186
        %v191 = vmul.f32 %v189, %v187
        %v192 = vlaneseq
        %v193 = vshrl.u32 %v192, 7
        %v194 = vadd.s32 %v193, 8
        %v195 = vrot.slane %v186, 7
        %v196 = vrot.slane %v187, 7
        %vm197 = vcmp.lt.s32.totalorder %v193, 1
        %v198 = vsel %vm197, %v195, %v196
        %v199 = vsel %vm197, %v196, %v195
        %vm200 = vcmp.ge.s32.totalorder %v193, 1
        %vm201 = vcmp.ge.s32.totalorder %v194, 1
        %s202 = sld [smem:[#allocation6]]
        %v203 = vsel %vm200, %v199, 0.0
        %v204 = vsel %vm201, %v198, 0.0
        %v205 = vstv %s202
        %v206 = vmul.f32 %v205, %v203
        %v207 = vmul.f32 %v205, %v204
        %v208 = vadd.f32 %v190, %v206
        %v209 = vadd.f32 %v191, %v207
        %v210 = vrot.slane %v186, 1
        %v211 = vrot.slane %v187, 1
        %vm212 = vcmp.lt.s32.totalorder %v193, 7
        %v213 = vsel %vm212, %v210, %v211
        %v214 = vsel %vm212, %v211, %v210
        %vm215 = vcmp.lt.s32.totalorder %v193, 15
        %vm216 = vcmp.lt.s32.totalorder %v194, 15
        %s217 = sld [smem:[#allocation6 + $0x2]]
        %v218 = vsel %vm215, %v213, 0.0
        %v219 = vsel %vm216, %v214, 0.0
        %v220 = vstv %s217
        %v221 = vmul.f32 %v220, %v218
        %v222 = vmul.f32 %v220, %v219
        %v223 = vadd.f32 %v208, %v221
        %v224 = vadd.f32 %v209, %v222
        %v225 = vxor.u32 %v223, 2147483648
        %v226 = vxor.u32 %v224, 2147483648
        %v227 = vmul.f32 %v225, 1.442695
        %v228 = vpow.pop %v227
        %v229 = vmul.f32 %v226, 1.442695
        %v230 = vpow.pop %v229
        %v231 = vadd.f32 %v228, 1.0
        %v232 = vadd.f32 %v230, 1.0
        %v233 = vrcp.pop %v231
        %v234 = vmul.f32 1.0, %v233
        %v235 = vrcp.pop %v232
        %v236 = vmul.f32 1.0, %v235
        %238 = vset.pattern.permute.xlu0 0
        %239 = vperm.xlu0 %238, %v234
        %v240 = vpop.permute.xlu0 %239
        %243 = vset.pattern.permute.xlu0 0
        %244 = vperm.xlu0 %243, %v236
        %v245 = vpop.permute.xlu0 %244
        %v247 = vmul.f32 %v176, %v240
        %v248 = vmul.f32 %v177, %v240
        %v249 = vmul.f32 %v178, %v245
        %v250 = vmul.f32 %v179, %v245
        %251 = vst [vmem:[%s175] sm:$0xff] %v247
        %252 = vst [vmem:[%s175 + $0x8] sm:$0xff] %v248
        %253 = vst [vmem:[%s175 + $0x10] sm:$0xff] %v249
        %254 = vst [vmem:[%s175 + $0x18] sm:$0xff] %v250
        %s255 = sand.u32 %s75, 1
        %s256 = scalar_lea.sflag [#allocation4], %s255
        %s257 = sand.u32 %s75, 1
        %s258 = smul.addr %s257, 32
        %s259 = scalar_lea.vmem [#allocation7], %s258
        // Predicated region
        $region37: #{tpu_custom_call.1} parent=27 // pred_check
          %p260 = pneg %p85
        $region38: #{tpu_custom_call.1} parent=27 // pred_check_branch
          %262 = sbr.rel (%p260) target = $region40
        $region39: #{tpu_custom_call.1} parent=27 // pred_region
          %s264 = ssub.s32 512, 512
          %265 = vsyncadd %s256, %s264
          %s266 = smul.addr %s20, 4
          %s267 = smul.addr %s266, 128
          %s268 = scalar_lea.hbm %s2, %s267
          %s269 = sshll.u32 %s259, 4
          %s270 = int_to_ptr.vmem [resolvable:$true] %s269
          %275 = dma.vmem_to_hbm [thread:$0]  %s270, 512, %s268, %s256, 256, 256, 16
        $region40: #{tpu_custom_call.1} parent=27 // pred_fallthru
          _
      $region28: #{tpu_custom_call.1} parent=5 // pred_fallthru
        _
      %p276 = scmp.le.s32.totalorder 2, %s15
      // Predicated region
      $region41: #{tpu_custom_call.1} parent=5 // pred_check
        %p277 = pneg %p276
      $region42: #{tpu_custom_call.1} parent=5 // pred_check_branch
        %279 = sbr.rel (%p277) target = $region44
      $region43: #{tpu_custom_call.1} parent=5 // pred_region
        %s280 = ssub.s32 %s15, 2
        // Predicated region
        $region45: #{tpu_custom_call.1} parent=43 // pred_check
          %p281 = pneg %p91
        $region46: #{tpu_custom_call.1} parent=43 // pred_check_branch
          %283 = sbr.rel (%p281) target = $region48
        $region47: #{tpu_custom_call.1} parent=43 // pred_region
          %s284 = sand.u32 %s76, 1
          %s285 = scalar_lea.sflag [#allocation4], %s284
          %s286 = sand.u32 %s76, 1
          %s287 = smul.addr %s286, 32
          %s288 = scalar_lea.vmem [#allocation7], %s287
          %289 = dma.done %s285, 512
        $region48: #{tpu_custom_call.1} parent=43 // pred_fallthru
          _
      $region44: #{tpu_custom_call.1} parent=5 // pred_fallthru
        _
    $region6: #{tpu_custom_call.1} parent=1 // loop_footer
      %s19 = sadd.s32 1, %s15
    $region7: #{tpu_custom_call.1} parent=1 // loop_footer_branch
      %14 = sbr.rel target = $region3
    $region8: #{tpu_custom_call.1} parent=1 // loop_exit
      _
    %290 = vsyncpa [#allocation3], 1
    %s291 = scalar_lea.sflag [#allocation3], 1
    %292 = vsyncpa %s291, 1
    %293 = vsyncpa [#allocation4], 1
    %s294 = scalar_lea.sflag [#allocation4], 1
    %295 = vsyncpa %s294, 1
    %296 = vsyncpa [#allocation5], 1
    %s297 = scalar_lea.sflag [#allocation5], 1
    %298 = vsyncpa %s297, 1

</llo_original>
